<compile_context>
chip_gen: v5e
topology: v5e:2x2
jax: 0.10.0
libtpu: 0.0.40
codegen_flags: <defaults>
</compile_context>

<pallas_src>
import functools

import jax
import jax.numpy as jnp
import numpy as np
from jax.experimental import pallas as pl
from jax.experimental.pallas import tpu as pltpu


def aff_kernel(x_ref, r_ref, xg_ref, w1_ref, b1_ref, w2_ref, b2_ref,
               xo_ref, ro_ref):
    # x block is channel-major (1, C, TM); residual block keeps its native
    # position-major layout (1, TM, C) — no wrapper transposes anywhere.
    x = x_ref[0].astype(jnp.float32)                      # (C, TM)
    r = r_ref[0].astype(jnp.float32)                      # (TM, C)
    w1 = w1_ref[...]                                      # (ci, C)  (BN folded)
    w2 = w2_ref[...]                                      # (C, ci)  (BN folded)

    # local branch on xa = x + r^T without materializing r^T:
    #   W1 @ (x + r^T) = W1 @ x + dot_general(W1, r)  [contract last dims, Q·K^T pattern]
    h = jnp.dot(w1, x, preferred_element_type=jnp.float32)            # (ci, TM)
    h = h + jax.lax.dot_general(w1, r, (((1,), (1,)), ((), ())),
                                preferred_element_type=jnp.float32)
    h = jnp.maximum(h + b1_ref[...], 0.0)
    xl = jnp.dot(w2, h, preferred_element_type=jnp.float32) + b2_ref[...]  # (C, TM)

    # global branch was hoisted to the wrapper: xg is a per-batch (C, 1) column
    wei = jax.nn.sigmoid(xl + xg_ref[0])                               # (C, TM)

    xo_ref[0] = (x * wei).astype(xo_ref.dtype)            # lane-dense store

    # wei^T via an identity matmul on the MXU (exact f32, guaranteed lowering;
    # MXU has plenty of slack), keeping the residual path in (TM, C) end to end.
    C = wei.shape[0]
    rows = jax.lax.broadcasted_iota(jnp.int32, (C, C), 0)
    cols = jax.lax.broadcasted_iota(jnp.int32, (C, C), 1)
    eye = (rows == cols).astype(jnp.float32)
    wei_t = jax.lax.dot_general(wei, eye, (((0,), (0,)), ((), ())),
                                preferred_element_type=jnp.float32)   # (TM, C)
    rw = r * wei_t
    ro_ref[0] = (r - rw).astype(ro_ref.dtype)             # residual * (1 - wei)


def _pick_tile(L, cap=1024):
    """Largest multiple-of-128 divisor of L that is <= cap, else full L."""
    if L <= cap:
        return L                     # full extent is always a legal block dim
    for tm in range(cap, 127, -128):
        if L % tm == 0:
            return tm
    return L


def make_aff_params(channels=64, r=4, seed=0):
    """Deterministic synthetic parameters.

    Conv2d bias + BatchNorm (eval mode) are represented as a per-channel
    (scale, bias) pair applied after each channel-mixing matmul.
    """
    ci = channels // r
    key = jax.random.PRNGKey(seed)
    ks = jax.random.split(key, 12)

    def w(k, shape, fan_in):
        return jax.random.normal(k, shape, jnp.float32) / np.sqrt(fan_in)

    return dict(
        lw1=w(ks[0], (channels, ci), channels),
        ls1=0.5 + 0.1 * jax.random.uniform(ks[1], (1, ci), jnp.float32),
        lb1=0.05 * jax.random.normal(ks[2], (1, ci), jnp.float32),
        lw2=w(ks[3], (ci, channels), ci),
        ls2=0.5 + 0.1 * jax.random.uniform(ks[4], (1, channels), jnp.float32),
        lb2=0.05 * jax.random.normal(ks[5], (1, channels), jnp.float32),
        gw1=w(ks[6], (channels, ci), channels),
        gs1=0.5 + 0.1 * jax.random.uniform(ks[7], (1, ci), jnp.float32),
        gb1=0.05 * jax.random.normal(ks[8], (1, ci), jnp.float32),
        gw2=w(ks[9], (ci, channels), ci),
        gs2=0.5 + 0.1 * jax.random.uniform(ks[10], (1, channels), jnp.float32),
        gb2=0.05 * jax.random.normal(ks[11], (1, channels), jnp.float32),
    )


@functools.partial(jax.jit, static_argnames=("fuse",))
def aff_forward(x_nchw, residual_blc, params, fuse=False):
    B, C, H, W = x_nchw.shape
    L = H * W
    assert residual_blc.shape == (B, L, C), "input feature has wrong size"
    ci = params["lw1"].shape[1]

    # ---- layouts: x stays NCHW-flat (B, C, L); residual stays (B, L, C) ----
    x_bcl = x_nchw.reshape(B, C, L)                       # free (contiguous view)

    # ---- fold BN scales into the conv weights (tiny, O(C*ci)) --------------
    w1t = (params["lw1"] * params["ls1"]).T               # (ci, C)
    b1c = params["lb1"].reshape(ci, 1)                    # (ci, 1)
    w2t = (params["lw2"] * params["ls2"]).T               # (C, ci)
    b2c = params["lb2"].reshape(C, 1)                     # (C, 1)
    gw1f = params["gw1"] * params["gs1"]                  # (C, ci)
    gw2f = params["gw2"] * params["gs2"]                  # (ci, C)

    # ---- global branch = pass 1 over the data (per-batch mean of xa) -------
    pooled = jnp.mean(x_bcl.astype(jnp.float32), axis=2) \
        + jnp.mean(residual_blc.astype(jnp.float32), axis=1)      # (B, C)
    hg = jnp.maximum(pooled @ gw1f + params["gb1"], 0.0)          # (B, ci)
    xg = hg @ gw2f + params["gb2"]                                # (B, C)
    xg_col = xg[:, :, None]                                       # (B, C, 1)

    # ---- Pallas call: grid over (batch, spatial tiles), both parallel ------
    tm = _pick_tile(L)
    grid = (B, L // tm)

    x_spec = pl.BlockSpec((1, C, tm), lambda b, m: (b, 0, m))     # channel-major
    r_spec = pl.BlockSpec((1, tm, C), lambda b, m: (b, m, 0))     # native (L, C)
    wspec = lambda shape: pl.BlockSpec(shape, lambda b, m: (0, 0))

    xo, ro = pl.pallas_call(
        aff_kernel,
        out_shape=(jax.ShapeDtypeStruct((B, C, L), x_nchw.dtype),
                   jax.ShapeDtypeStruct((B, L, C), residual_blc.dtype)),
        grid_spec=pltpu.PrefetchScalarGridSpec(
            num_scalar_prefetch=0,
            grid=grid,
            in_specs=[
                x_spec, r_spec,
                pl.BlockSpec((1, C, 1), lambda b, m: (b, 0, 0)),   # xg column
                wspec((ci, C)), wspec((ci, 1)),
                wspec((C, ci)), wspec((C, 1)),
            ],
            out_specs=[x_spec, r_spec],
        ),
        compiler_params=pltpu.CompilerParams(
            dimension_semantics=("parallel", "parallel")),
    )(x_bcl, residual_blc, xg_col, w1t, b1c, w2t, b2c)

    if fuse:
        # 2*x*wei + 2*residual*(1-wei), returned as (B, L, C)
        fused = 2.0 * (jnp.transpose(xo, (0, 2, 1)).astype(jnp.float32)
                       + ro.astype(jnp.float32))
        return fused.astype(residual_blc.dtype)
    x_out = xo.reshape(B, C, H, W)                        # free: already NCHW layout
    return x_out, ro                                      # ro is already (B, L, C)


def aff_reference(x_nchw, residual_blc, params):
    """Pure-JAX row-major reference (BN kept unfolded) for verification."""
    B, C, H, W = x_nchw.shape
    L = H * W
    x = jnp.transpose(x_nchw, (0, 2, 3, 1)).reshape(B, L, C)
    r = residual_blc
    xa = x + r
    h = jnp.maximum(xa @ params["lw1"] * params["ls1"] + params["lb1"], 0.0)
    xl = h @ params["lw2"] * params["ls2"] + params["lb2"]
    pooled = jnp.mean(xa, axis=1, keepdims=True)
    hg = jnp.maximum(pooled @ params["gw1"] * params["gs1"] + params["gb1"], 0.0)
    xg = hg @ params["gw2"] * params["gs2"] + params["gb2"]
    wei = jax.nn.sigmoid(xl + xg)
    x_out = jnp.transpose((x * wei).reshape(B, H, W, C), (0, 3, 1, 2))
    r_out = r * (1.0 - wei)
    return x_out, r_out


if __name__ == "__main__":
    B, C, H, W, r = 2, 64, 8, 8, 4      # channels=64, r=4 are the module defaults
    L = H * W

    key = jax.random.PRNGKey(0)
    kx, kr = jax.random.split(key)
    x = jax.random.normal(kx, (B, C, H, W), jnp.float32)
    residual = jax.random.normal(kr, (B, L, C), jnp.float32)
    params = make_aff_params(channels=C, r=r, seed=0)

    x_out, resid_out = aff_forward(x, residual, params, fuse=False)
    jax.block_until_ready((x_out, resid_out))

    x_ref, r_ref = aff_reference(x, residual, params)
    np.testing.assert_allclose(np.asarray(x_out), np.asarray(x_ref),
                               rtol=1e-4, atol=1e-4)
    np.testing.assert_allclose(np.asarray(resid_out), np.asarray(r_ref),
                               rtol=1e-4, atol=1e-4)

    print("KERNEL_OK")
</pallas_src>

<mosaic_0001>
module attributes {stable_mosaic.version = 11 : i64} {
  func.func @aff_kernel(%arg0: i32, %arg1: i32, %arg2: memref<1x64x64xf32, #tpu.memory_space<vmem>>, %arg3: memref<1x64x64xf32, #tpu.memory_space<vmem>>, %arg4: memref<1x64x1xf32, #tpu.memory_space<vmem>>, %arg5: memref<16x64xf32, #tpu.memory_space<vmem>>, %arg6: memref<16x1xf32, #tpu.memory_space<vmem>>, %arg7: memref<64x16xf32, #tpu.memory_space<vmem>>, %arg8: memref<64x1xf32, #tpu.memory_space<vmem>>, %arg9: memref<1x64x64xf32, #tpu.memory_space<vmem>>, %arg10: memref<1x64x64xf32, #tpu.memory_space<vmem>>) attributes {dimension_semantics = [#tpu.dimension_semantics<parallel>, #tpu.dimension_semantics<parallel>], iteration_bounds = array<i64: 2, 1>, scalar_prefetch = 0 : i64, scratch_operands = 0 : i64, tpu.core_type = #tpu.core_type<tc>, window_params = [{transform_indices = @transform_0, window_bounds = array<i64: 1, 64, 64>}, {transform_indices = @transform_1, window_bounds = array<i64: 1, 64, 64>}, {transform_indices = @transform_2, window_bounds = array<i64: 1, 64, 1>}, {pipeline_mode = #tpu.pipeline_mode<synchronous>, transform_indices = @transform_3, window_bounds = array<i64: 16, 64>}, {pipeline_mode = #tpu.pipeline_mode<synchronous>, transform_indices = @transform_4, window_bounds = array<i64: 16, 1>}, {pipeline_mode = #tpu.pipeline_mode<synchronous>, transform_indices = @transform_5, window_bounds = array<i64: 64, 16>}, {pipeline_mode = #tpu.pipeline_mode<synchronous>, transform_indices = @transform_6, window_bounds = array<i64: 64, 1>}, {transform_indices = @transform_7, window_bounds = array<i64: 1, 64, 64>}, {transform_indices = @transform_8, window_bounds = array<i64: 1, 64, 64>}]} {
    %c0 = arith.constant 0 : index
    %c0_0 = arith.constant 0 : index
    %c0_1 = arith.constant 0 : index
    %0 = vector.load %arg2[%c0, %c0_0, %c0_1] : memref<1x64x64xf32, #tpu.memory_space<vmem>>, vector<1x64x64xf32>
    %1 = vector.shape_cast %0 : vector<1x64x64xf32> to vector<64x64xf32>
    %c0_2 = arith.constant 0 : index
    %c0_3 = arith.constant 0 : index
    %c0_4 = arith.constant 0 : index
    %2 = vector.load %arg3[%c0_2, %c0_3, %c0_4] : memref<1x64x64xf32, #tpu.memory_space<vmem>>, vector<1x64x64xf32>
    %3 = vector.shape_cast %2 : vector<1x64x64xf32> to vector<64x64xf32>
    %c0_5 = arith.constant 0 : index
    %c0_6 = arith.constant 0 : index
    %4 = vector.load %arg5[%c0_5, %c0_6] : memref<16x64xf32, #tpu.memory_space<vmem>>, vector<16x64xf32>
    %c0_7 = arith.constant 0 : index
    %c0_8 = arith.constant 0 : index
    %5 = vector.load %arg7[%c0_7, %c0_8] : memref<64x16xf32, #tpu.memory_space<vmem>>, vector<64x16xf32>
    %cst = arith.constant dense<0.000000e+00> : vector<16x64xf32>
    %6 = tpu.matmul %4, %1, %cst {dimension_numbers = #tpu.dot_dimension_numbers<[1], [0], [0], [1], [0, 0, 1, 1], [], []>} : vector<16x64xf32>, vector<64x64xf32>, vector<16x64xf32> -> vector<16x64xf32>
    %cst_9 = arith.constant dense<0.000000e+00> : vector<16x64xf32>
    %7 = tpu.matmul %4, %3, %cst_9 {dimension_numbers = #tpu.dot_dimension_numbers<[1], [1], [0], [0], [0, 0, 1, 0], [], []>} : vector<16x64xf32>, vector<64x64xf32>, vector<16x64xf32> -> vector<16x64xf32>
    %8 = arith.addf %6, %7 : vector<16x64xf32>
    %c0_10 = arith.constant 0 : index
    %c0_11 = arith.constant 0 : index
    %9 = vector.load %arg6[%c0_10, %c0_11] : memref<16x1xf32, #tpu.memory_space<vmem>>, vector<16x1xf32>
    %10 = vector.broadcast %9 : vector<16x1xf32> to vector<16x64xf32>
    %11 = arith.addf %8, %10 : vector<16x64xf32>
    %cst_12 = arith.constant 0.000000e+00 : f32
    %12 = vector.broadcast %cst_12 : f32 to vector<16x64xf32>
    %13 = arith.maximumf %11, %12 : vector<16x64xf32>
    %cst_13 = arith.constant dense<0.000000e+00> : vector<64x64xf32>
    %14 = tpu.matmul %5, %13, %cst_13 {dimension_numbers = #tpu.dot_dimension_numbers<[1], [0], [0], [1], [0, 0, 1, 1], [], []>} : vector<64x16xf32>, vector<16x64xf32>, vector<64x64xf32> -> vector<64x64xf32>
    %c0_14 = arith.constant 0 : index
    %c0_15 = arith.constant 0 : index
    %15 = vector.load %arg8[%c0_14, %c0_15] : memref<64x1xf32, #tpu.memory_space<vmem>>, vector<64x1xf32>
    %16 = vector.broadcast %15 : vector<64x1xf32> to vector<64x64xf32>
    %17 = arith.addf %14, %16 : vector<64x64xf32>
    %c0_16 = arith.constant 0 : index
    %c0_17 = arith.constant 0 : index
    %c0_18 = arith.constant 0 : index
    %18 = vector.load %arg4[%c0_16, %c0_17, %c0_18] : memref<1x64x1xf32, #tpu.memory_space<vmem>>, vector<1x64x1xf32>
    %19 = vector.shape_cast %18 : vector<1x64x1xf32> to vector<64x1xf32>
    %20 = vector.broadcast %19 : vector<64x1xf32> to vector<64x64xf32>
    %21 = arith.addf %17, %20 : vector<64x64xf32>
    %22 = arith.negf %21 : vector<64x64xf32>
    %23 = math.exp %22 : vector<64x64xf32>
    %cst_19 = arith.constant 1.000000e+00 : f32
    %24 = vector.broadcast %cst_19 : f32 to vector<64x64xf32>
    %25 = arith.addf %24, %23 : vector<64x64xf32>
    %26 = arith.divf %24, %25 : vector<64x64xf32>
    %27 = arith.mulf %1, %26 : vector<64x64xf32>
    %c0_20 = arith.constant 0 : index
    %c0_21 = arith.constant 0 : index
    %c0_22 = arith.constant 0 : index
    %28 = vector.load %arg9[%c0_20, %c0_21, %c0_22] : memref<1x64x64xf32, #tpu.memory_space<vmem>>, vector<1x64x64xf32>
    %29 = vector.shape_cast %28 : vector<1x64x64xf32> to vector<64x64xf32>
    %30 = vector.shape_cast %27 : vector<64x64xf32> to vector<1x64x64xf32>
    tpu.vector_store %arg9[%c0_20, %c0_21, %c0_22], %30 {strides = array<i32>} : memref<1x64x64xf32, #tpu.memory_space<vmem>>, vector<1x64x64xf32>,
    %31 = tpu.iota {dimensions = array<i32: 0>} : vector<64x64xi32>
    %32 = tpu.iota {dimensions = array<i32: 1>} : vector<64x64xi32>
    %33 = arith.cmpi eq, %31, %32 : vector<64x64xi32>
    %34 = arith.extui %33 : vector<64x64xi1> to vector<64x64xi32>
    %35 = arith.sitofp %34 : vector<64x64xi32> to vector<64x64xf32>
    %cst_23 = arith.constant dense<0.000000e+00> : vector<64x64xf32>
    %36 = tpu.matmul %26, %35, %cst_23 {dimension_numbers = #tpu.dot_dimension_numbers<[0], [0], [1], [1], [0, 1, 1, 1], [], []>} : vector<64x64xf32>, vector<64x64xf32>, vector<64x64xf32> -> vector<64x64xf32>
    %37 = arith.mulf %3, %36 : vector<64x64xf32>
    %38 = arith.subf %3, %37 : vector<64x64xf32>
    %c0_24 = arith.constant 0 : index
    %c0_25 = arith.constant 0 : index
    %c0_26 = arith.constant 0 : index
    %39 = vector.load %arg10[%c0_24, %c0_25, %c0_26] : memref<1x64x64xf32, #tpu.memory_space<vmem>>, vector<1x64x64xf32>
    %40 = vector.shape_cast %39 : vector<1x64x64xf32> to vector<64x64xf32>
    %41 = vector.shape_cast %38 : vector<64x64xf32> to vector<1x64x64xf32>
    tpu.vector_store %arg10[%c0_24, %c0_25, %c0_26], %41 {strides = array<i32>} : memref<1x64x64xf32, #tpu.memory_space<vmem>>, vector<1x64x64xf32>,
    return
  }
  func.func @transform_0(%arg0: i32, %arg1: i32) -> (i32, i32, i32) {
    %c0_i32 = arith.constant 0 : i32
    %c0_i32_0 = arith.constant 0 : i32
    return %arg0, %c0_i32, %arg1 : i32, i32, i32
  }
  func.func @transform_1(%arg0: i32, %arg1: i32) -> (i32, i32, i32) {
    %c0_i32 = arith.constant 0 : i32
    %c0_i32_0 = arith.constant 0 : i32
    return %arg0, %arg1, %c0_i32 : i32, i32, i32
  }
  func.func @transform_2(%arg0: i32, %arg1: i32) -> (i32, i32, i32) {
    %c0_i32 = arith.constant 0 : i32
    %c0_i32_0 = arith.constant 0 : i32
    %c0_i32_1 = arith.constant 0 : i32
    return %arg0, %c0_i32, %c0_i32_0 : i32, i32, i32
  }
  func.func @transform_3(%arg0: i32, %arg1: i32) -> (i32, i32) {
    %c0_i32 = arith.constant 0 : i32
    %c0_i32_0 = arith.constant 0 : i32
    %c0_i32_1 = arith.constant 0 : i32
    return %c0_i32, %c0_i32_0 : i32, i32
  }
  func.func @transform_4(%arg0: i32, %arg1: i32) -> (i32, i32) {
    %c0_i32 = arith.constant 0 : i32
    %c0_i32_0 = arith.constant 0 : i32
    %c0_i32_1 = arith.constant 0 : i32
    return %c0_i32, %c0_i32_0 : i32, i32
  }
  func.func @transform_5(%arg0: i32, %arg1: i32) -> (i32, i32) {
    %c0_i32 = arith.constant 0 : i32
    %c0_i32_0 = arith.constant 0 : i32
    %c0_i32_1 = arith.constant 0 : i32
    return %c0_i32, %c0_i32_0 : i32, i32
  }
  func.func @transform_6(%arg0: i32, %arg1: i32) -> (i32, i32) {
    %c0_i32 = arith.constant 0 : i32
    %c0_i32_0 = arith.constant 0 : i32
    %c0_i32_1 = arith.constant 0 : i32
    return %c0_i32, %c0_i32_0 : i32, i32
  }
  func.func @transform_7(%arg0: i32, %arg1: i32) -> (i32, i32, i32) {
    %c0_i32 = arith.constant 0 : i32
    %c0_i32_0 = arith.constant 0 : i32
    return %arg0, %c0_i32, %arg1 : i32, i32, i32
  }
  func.func @transform_8(%arg0: i32, %arg1: i32) -> (i32, i32, i32) {
    %c0_i32 = arith.constant 0 : i32
    %c0_i32_0 = arith.constant 0 : i32
    return %arg0, %arg1, %c0_i32 : i32, i32, i32
  }
}

</mosaic_0001>

<llo_original>
// kernel: aff_forward.1
$region0: #{aff_forward.1}
  #allocation0 [shape = 'u32[]', space=smem, size = 0x4, offset = 0x4, fixed_abs, tag = 'smem constant byte address 0x4 - core index']
  #allocation1 [shape = 'u32[72,128]{1,0:T(1,128)}', space=vmem, size = 0x9000, scoped, tag = 'internal scratch']
  %s0 = inlined_call_operand.vmem [shape: f32[2,64,64], index: 0, kind: input, shape index: {}]
  %s1 = inlined_call_operand.vmem [shape: f32[2,64,64], index: 1, kind: input, shape index: {}]
  %s2 = inlined_call_operand.vmem [shape: f32[2,64,1], index: 2, kind: input, shape index: {}]
  %s3 = inlined_call_operand.vmem [shape: f32[16,64], index: 3, kind: input, shape index: {}]
  %s4 = inlined_call_operand.vmem [shape: f32[16,1], index: 4, kind: input, shape index: {}]
  %s5 = inlined_call_operand.vmem [shape: f32[64,16], index: 5, kind: input, shape index: {}]
  %s6 = inlined_call_operand.vmem [shape: f32[64,1], index: 6, kind: input, shape index: {}]
  %s7 = inlined_call_operand.vmem [shape: f32[2,64,64], index: 7, kind: output, shape index: {0}]
  %s8 = inlined_call_operand.hbm [shape: f32[2,64,64], index: 8, kind: output, shape index: {1}]
  %9 = xla_tuple %s7, %s8
  %s10 = sld [smem:[#allocation0]]
  $region69: #{aff_forward.1} parent=0
    _
  %s12 = ssub.s32 1, %s10
  %s13 = scalar_select 0, %s12, %s10
  $region1: #{aff_forward.1} parent=0
    #allocation2 [shape = 'u8[65536]{0}', space=vmem, size = 0x10000, scoped, tag = 'output window, operand 1']
    #allocation3 [shape = 's32[2]{0}', space=sflag, size = 0x8, scoped, tag = 'scoped memory for aff_forward.1']
    %14 = vsyncpa [#allocation3], 0
    %s15 = scalar_lea.sflag [#allocation3], 1
    %16 = vsyncpa %s15, 0
    loop: start=0, step=1, limit=4
    $region2: #{aff_forward.1} parent=1 // loop_pre_header
      _
    $region3: #{aff_forward.1} parent=1 // loop_header
      %s18 = sphi 0, %s22
      %p19 = scmp.ge.s32.totalorder %s18, 4
      %s25 = sphi 0, %s37
      %s26 = sphi 0, %s33
      %s27 = sphi 0, %s25
      %s28 = sphi 0, %s26
      %s29 = sphi 0, %s27
      %s30 = sphi 0, %s28
      %s42 = sphi 0, %s44
      %s45 = sphi 0, %s42
      %s46 = sphi 0, %s45
      %s62 = sphi 0, %s46
      %s70 = sphi 0, %s72
      %s73 = sphi 0, %s70
      %s74 = sphi 0, %s73
      %s90 = sphi 0, %s74
      %s96 = sphi 0, %s98
      %s99 = sphi 0, %s96
      %s100 = sphi 0, %s99
      %s116 = sphi 0, %s100
      %s120 = sphi 0, %s120
      %s122 = sphi 0, %s120
      %s123 = sphi 0, %s122
      %s137 = sphi 0, %s123
      %s141 = sphi 0, %s141
      %s143 = sphi 0, %s141
      %s144 = sphi 0, %s143
      %s158 = sphi 0, %s144
      %s162 = sphi 0, %s162
      %s164 = sphi 0, %s162
      %s165 = sphi 0, %s164
      %s179 = sphi 0, %s165
      %s183 = sphi 0, %s183
      %s185 = sphi 0, %s183
      %s186 = sphi 0, %s185
      %s200 = sphi 0, %s186
      %s208 = sphi 0, %s210
      %s211 = sphi 0, %s208
      %s212 = sphi 0, %s211
      %s228 = sphi 0, %s212
      %s236 = sphi 0, %s238
      %s239 = sphi 0, %s236
      %s240 = sphi 0, %s239
      %s256 = sphi 0, %s240
    $region4: #{aff_forward.1} parent=1 // loop_header_branch
      %21 = sbr.rel (%p19) target = $region8
    $region5: #{aff_forward.1} parent=1 // loop_body
      %s23 = ssub.s32 %s18, 1
      %s24 = ssub.s32 %s18, 2
      %s31 = sadd.s32 1, %s26
      %p32 = scmp.ge.s32.totalorder %s31, 1
      %s33 = scalar_select %p32, 0, %s31
      %s34 = sadd.s32 1, %s25
      %s35 = scalar_select %p32, %s34, %s25
      %p36 = scmp.ge.s32.totalorder %s35, 2
      %s37 = scalar_select %p36, 0, %s35
      %s38 = ssub.s32 %s25, %s37
      %s39 = ssub.s32 %s26, %s33
      %s40 = sor.u32 %s38, %s39
      %p41 = scmp.eq.s32.totalorder %s40, 0
      %s43 = sadd.s32 %s42, 1
      %s44 = scalar_select %p41, %s42, %s43
      %p47 = pneg %p41
      %p48 = scmp.eq.s32.totalorder %s18, 1
      %p49 = por %p47, %p48
      %p50 = scmp.ne.s32.totalorder %s42, %s45
      %p51 = scmp.eq.s32.totalorder %s18, 0
      %p52 = por %p50, %p51
      %p53 = scmp.ne.s32.totalorder %s42, %s45
      %p54 = scmp.eq.s32.totalorder %s23, 1
      %p55 = por %p53, %p54
      %p56 = scmp.ne.s32.totalorder %s45, %s46
      %p57 = scmp.eq.s32.totalorder %s23, 0
      %p58 = por %p56, %p57
      %p59 = scmp.ne.s32.totalorder %s45, %s46
      %p60 = scmp.eq.s32.totalorder %s24, 1
      %p61 = por %p59, %p60
      %p63 = scmp.ne.s32.totalorder %s46, %s62
      %p64 = scmp.eq.s32.totalorder %s24, 0
      %p65 = por %p63, %p64
      %s66 = ssub.s32 %s25, %s37
      %s67 = ssub.s32 %s26, %s33
      %s68 = sor.u32 %s66, %s67
      %p69 = scmp.eq.s32.totalorder %s68, 0
      %s71 = sadd.s32 %s70, 1
      %s72 = scalar_select %p69, %s70, %s71
      %p75 = pneg %p69
      %p76 = scmp.eq.s32.totalorder %s18, 1
      %p77 = por %p75, %p76
      %p78 = scmp.ne.s32.totalorder %s70, %s73
      %p79 = scmp.eq.s32.totalorder %s18, 0
      %p80 = por %p78, %p79
      %p81 = scmp.ne.s32.totalorder %s70, %s73
      %p82 = scmp.eq.s32.totalorder %s23, 1
      %p83 = por %p81, %p82
      %p84 = scmp.ne.s32.totalorder %s73, %s74
      %p85 = scmp.eq.s32.totalorder %s23, 0
      %p86 = por %p84, %p85
      %p87 = scmp.ne.s32.totalorder %s73, %s74
      %p88 = scmp.eq.s32.totalorder %s24, 1
      %p89 = por %p87, %p88
      %p91 = scmp.ne.s32.totalorder %s74, %s90
      %p92 = scmp.eq.s32.totalorder %s24, 0
      %p93 = por %p91, %p92
      %s94 = ssub.s32 %s25, %s37
      %p95 = scmp.eq.s32.totalorder %s94, 0
      %s97 = sadd.s32 %s96, 1
      %s98 = scalar_select %p95, %s96, %s97
      %p101 = pneg %p95
      %p102 = scmp.eq.s32.totalorder %s18, 1
      %p103 = por %p101, %p102
      %p104 = scmp.ne.s32.totalorder %s96, %s99
      %p105 = scmp.eq.s32.totalorder %s18, 0
      %p106 = por %p104, %p105
      %p107 = scmp.ne.s32.totalorder %s96, %s99
      %p108 = scmp.eq.s32.totalorder %s23, 1
      %p109 = por %p107, %p108
      %p110 = scmp.ne.s32.totalorder %s99, %s100
      %p111 = scmp.eq.s32.totalorder %s23, 0
      %p112 = por %p110, %p111
      %p113 = scmp.ne.s32.totalorder %s99, %s100
      %p114 = scmp.eq.s32.totalorder %s24, 1
      %p115 = por %p113, %p114
      %p117 = scmp.ne.s32.totalorder %s100, %s116
      %p118 = scmp.eq.s32.totalorder %s24, 0
      %p119 = por %p117, %p118
      %s121 = sadd.s32 %s120, 1
      %p124 = scmp.eq.s32.totalorder %s18, 1
      %p125 = scmp.ne.s32.totalorder %s120, %s122
      %p126 = scmp.eq.s32.totalorder %s18, 0
      %p127 = por %p125, %p126
      %p128 = scmp.ne.s32.totalorder %s120, %s122
      %p129 = scmp.eq.s32.totalorder %s23, 1
      %p130 = por %p128, %p129
      %p131 = scmp.ne.s32.totalorder %s122, %s123
      %p132 = scmp.eq.s32.totalorder %s23, 0
      %p133 = por %p131, %p132
      %p134 = scmp.ne.s32.totalorder %s122, %s123
      %p135 = scmp.eq.s32.totalorder %s24, 1
      %p136 = por %p134, %p135
      %p138 = scmp.ne.s32.totalorder %s123, %s137
      %p139 = scmp.eq.s32.totalorder %s24, 0
      %p140 = por %p138, %p139
      %s142 = sadd.s32 %s141, 1
      %p145 = scmp.eq.s32.totalorder %s18, 1
      %p146 = scmp.ne.s32.totalorder %s141, %s143
      %p147 = scmp.eq.s32.totalorder %s18, 0
      %p148 = por %p146, %p147
      %p149 = scmp.ne.s32.totalorder %s141, %s143
      %p150 = scmp.eq.s32.totalorder %s23, 1
      %p151 = por %p149, %p150
      %p152 = scmp.ne.s32.totalorder %s143, %s144
      %p153 = scmp.eq.s32.totalorder %s23, 0
      %p154 = por %p152, %p153
      %p155 = scmp.ne.s32.totalorder %s143, %s144
      %p156 = scmp.eq.s32.totalorder %s24, 1
      %p157 = por %p155, %p156
      %p159 = scmp.ne.s32.totalorder %s144, %s158
      %p160 = scmp.eq.s32.totalorder %s24, 0
      %p161 = por %p159, %p160
      %s163 = sadd.s32 %s162, 1
      %p166 = scmp.eq.s32.totalorder %s18, 1
      %p167 = scmp.ne.s32.totalorder %s162, %s164
      %p168 = scmp.eq.s32.totalorder %s18, 0
      %p169 = por %p167, %p168
      %p170 = scmp.ne.s32.totalorder %s162, %s164
      %p171 = scmp.eq.s32.totalorder %s23, 1
      %p172 = por %p170, %p171
      %p173 = scmp.ne.s32.totalorder %s164, %s165
      %p174 = scmp.eq.s32.totalorder %s23, 0
      %p175 = por %p173, %p174
      %p176 = scmp.ne.s32.totalorder %s164, %s165
      %p177 = scmp.eq.s32.totalorder %s24, 1
      %p178 = por %p176, %p177
      %p180 = scmp.ne.s32.totalorder %s165, %s179
      %p181 = scmp.eq.s32.totalorder %s24, 0
      %p182 = por %p180, %p181
      %s184 = sadd.s32 %s183, 1
      %p187 = scmp.eq.s32.totalorder %s18, 1
      %p188 = scmp.ne.s32.totalorder %s183, %s185
      %p189 = scmp.eq.s32.totalorder %s18, 0
      %p190 = por %p188, %p189
      %p191 = scmp.ne.s32.totalorder %s183, %s185
      %p192 = scmp.eq.s32.totalorder %s23, 1
      %p193 = por %p191, %p192
      %p194 = scmp.ne.s32.totalorder %s185, %s186
      %p195 = scmp.eq.s32.totalorder %s23, 0
      %p196 = por %p194, %p195
      %p197 = scmp.ne.s32.totalorder %s185, %s186
      %p198 = scmp.eq.s32.totalorder %s24, 1
      %p199 = por %p197, %p198
      %p201 = scmp.ne.s32.totalorder %s186, %s200
      %p202 = scmp.eq.s32.totalorder %s24, 0
      %p203 = por %p201, %p202
      %s204 = ssub.s32 %s25, %s37
      %s205 = ssub.s32 %s26, %s33
      %s206 = sor.u32 %s204, %s205
      %p207 = scmp.eq.s32.totalorder %s206, 0
      %s209 = sadd.s32 %s208, 1
      %s210 = scalar_select %p207, %s208, %s209
      %p213 = pneg %p207
      %p214 = scmp.eq.s32.totalorder %s18, 1
      %p215 = por %p213, %p214
      %p216 = scmp.ne.s32.totalorder %s208, %s211
      %p217 = scmp.eq.s32.totalorder %s18, 0
      %p218 = por %p216, %p217
      %p219 = scmp.ne.s32.totalorder %s208, %s211
      %p220 = scmp.eq.s32.totalorder %s23, 1
      %p221 = por %p219, %p220
      %p222 = scmp.ne.s32.totalorder %s211, %s212
      %p223 = scmp.eq.s32.totalorder %s23, 0
      %p224 = por %p222, %p223
      %p225 = scmp.ne.s32.totalorder %s211, %s212
      %p226 = scmp.eq.s32.totalorder %s24, 1
      %p227 = por %p225, %p226
      %p229 = scmp.ne.s32.totalorder %s212, %s228
      %p230 = scmp.eq.s32.totalorder %s24, 0
      %p231 = por %p229, %p230
      %s232 = ssub.s32 %s25, %s37
      %s233 = ssub.s32 %s26, %s33
      %s234 = sor.u32 %s232, %s233
      %p235 = scmp.eq.s32.totalorder %s234, 0
      %s237 = sadd.s32 %s236, 1
      %s238 = scalar_select %p235, %s236, %s237
      %p241 = pneg %p235
      %p242 = scmp.eq.s32.totalorder %s18, 1
      %p243 = por %p241, %p242
      %p244 = scmp.ne.s32.totalorder %s236, %s239
      %p245 = scmp.eq.s32.totalorder %s18, 0
      %p246 = por %p244, %p245
      %p247 = scmp.ne.s32.totalorder %s236, %s239
      %p248 = scmp.eq.s32.totalorder %s23, 1
      %p249 = por %p247, %p248
      %p250 = scmp.ne.s32.totalorder %s239, %s240
      %p251 = scmp.eq.s32.totalorder %s23, 0
      %p252 = por %p250, %p251
      %p253 = scmp.ne.s32.totalorder %s239, %s240
      %p254 = scmp.eq.s32.totalorder %s24, 1
      %p255 = por %p253, %p254
      %p257 = scmp.ne.s32.totalorder %s240, %s256
      %p258 = scmp.eq.s32.totalorder %s24, 0
      %p259 = por %p257, %p258
      %p260 = scmp.le.s32.totalorder 1, %s18
      %p261 = scmp.lt.s32.totalorder %s18, 3
      %p262 = pnand %p260, %p261
      %p263 = pneg %p262
      // Predicated region
      $region9: #{aff_forward.1} parent=5 // pred_check
        _
      $region10: #{aff_forward.1} parent=5 // pred_check_branch
        %265 = sbr.rel (%p262) target = $region12
      $region11: #{aff_forward.1} parent=5 // pred_region
        %s266 = ssub.s32 %s18, 1
        // Predicated region
        $region13: #{aff_forward.1} parent=11 // pred_check
          %p267 = pneg %p133
        $region14: #{aff_forward.1} parent=11 // pred_check_branch
          %269 = sbr.rel (%p267) target = $region16
        $region15: #{aff_forward.1} parent=11 // pred_region
          _
        $region16: #{aff_forward.1} parent=11 // pred_fallthru
          _
        // Predicated region
        $region17: #{aff_forward.1} parent=11 // pred_check
          %p270 = pneg %p154
        $region18: #{aff_forward.1} parent=11 // pred_check_branch
          %272 = sbr.rel (%p270) target = $region20
        $region19: #{aff_forward.1} parent=11 // pred_region
          _
        $region20: #{aff_forward.1} parent=11 // pred_fallthru
          _
        // Predicated region
        $region21: #{aff_forward.1} parent=11 // pred_check
          %p273 = pneg %p175
        $region22: #{aff_forward.1} parent=11 // pred_check_branch
          %275 = sbr.rel (%p273) target = $region24
        $region23: #{aff_forward.1} parent=11 // pred_region
          _
        $region24: #{aff_forward.1} parent=11 // pred_fallthru
          _
        // Predicated region
        $region25: #{aff_forward.1} parent=11 // pred_check
          %p276 = pneg %p196
        $region26: #{aff_forward.1} parent=11 // pred_check_branch
          %278 = sbr.rel (%p276) target = $region28
        $region27: #{aff_forward.1} parent=11 // pred_region
          _
        $region28: #{aff_forward.1} parent=11 // pred_fallthru
          _
      $region12: #{aff_forward.1} parent=5 // pred_fallthru
        _
      %p279 = scmp.lt.s32.totalorder %s18, 2
      // Predicated region
      $region29: #{aff_forward.1} parent=5 // pred_check
        %p280 = pneg %p279
      $region30: #{aff_forward.1} parent=5 // pred_check_branch
        %282 = sbr.rel (%p280) target = $region32
      $region31: #{aff_forward.1} parent=5 // pred_region
        // Predicated region
        $region33: #{aff_forward.1} parent=31 // pred_check
          %p283 = pneg %p52
        $region34: #{aff_forward.1} parent=31 // pred_check_branch
          %285 = sbr.rel (%p283) target = $region36
        $region35: #{aff_forward.1} parent=31 // pred_region
          %p286 = scmp.lt.s32.totalorder %s25, 1
          %s287 = scalar_select %p286, %s25, 1
          %p288 = scmp.lt.s32.totalorder %s26, 0
          %s289 = scalar_select %p288, %s26, 0
          %s290 = smul.addr %s287, 8
          %s291 = sadd.s32 %s289, %s290
          %s292 = smul.addr %s291, 8
          %s293 = scalar_lea.vmem %s0, %s292
        $region36: #{aff_forward.1} parent=31 // pred_fallthru
          _
        // Predicated region
        $region37: #{aff_forward.1} parent=31 // pred_check
          %p294 = pneg %p80
        $region38: #{aff_forward.1} parent=31 // pred_check_branch
          %296 = sbr.rel (%p294) target = $region40
        $region39: #{aff_forward.1} parent=31 // pred_region
          %s297 = smul.u32 8, %s26
          %p298 = scmp.lt.s32.totalorder %s25, 1
          %s299 = scalar_select %p298, %s25, 1
          %p300 = scmp.lt.s32.totalorder %s297, 7
          %s301 = scalar_select %p300, %s297, 7
          %s302 = smul.addr %s299, 8
          %s303 = sadd.s32 %s301, %s302
          %s304 = smul.addr %s303, 8
          %s305 = scalar_lea.vmem %s1, %s304
          %s306 = smul.u32 8, %s26
        $region40: #{aff_forward.1} parent=31 // pred_fallthru
          _
        // Predicated region
        $region41: #{aff_forward.1} parent=31 // pred_check
          %p307 = pneg %p106
        $region42: #{aff_forward.1} parent=31 // pred_check_branch
          %309 = sbr.rel (%p307) target = $region44
        $region43: #{aff_forward.1} parent=31 // pred_region
          %p310 = scmp.lt.s32.totalorder %s25, 1
          %s311 = scalar_select %p310, %s25, 1
          %s312 = smul.addr %s311, 8
          %s313 = smul.addr %s312, 8
          %s314 = scalar_lea.vmem %s2, %s313
        $region44: #{aff_forward.1} parent=31 // pred_fallthru
          _
      $region32: #{aff_forward.1} parent=5 // pred_fallthru
        _
      %p315 = scmp.le.s32.totalorder 1, %s18
      %p316 = scmp.lt.s32.totalorder %s18, 3
      %p317 = pnand %p315, %p316
      %p318 = pneg %p317
      // Predicated region
      $region45: #{aff_forward.1} parent=5 // pred_check
        _
      $region46: #{aff_forward.1} parent=5 // pred_check_branch
        %320 = sbr.rel (%p317) target = $region48
      $region47: #{aff_forward.1} parent=5 // pred_region
        %s321 = ssub.s32 %s18, 1
        %p322 = scmp.lt.s32.totalorder %s27, 1
        %s323 = scalar_select %p322, %s27, 1
        %p324 = scmp.lt.s32.totalorder %s28, 0
        %s325 = scalar_select %p324, %s28, 0
        %s326 = smul.addr %s323, 8
        %s327 = sadd.s32 %s325, %s326
        %s328 = smul.addr %s327, 8
        %s329 = scalar_lea.vmem %s0, %s328
        %p330 = pneg %p58
        %p331 = pneg %p55
        %s332 = smul.u32 8, %s28
        %p333 = scmp.lt.s32.totalorder %s27, 1
        %s334 = scalar_select %p333, %s27, 1
        %p335 = scmp.lt.s32.totalorder %s332, 7
        %s336 = scalar_select %p335, %s332, 7
        %s337 = smul.addr %s334, 8
        %s338 = sadd.s32 %s336, %s337
        %s339 = smul.addr %s338, 8
        %s340 = scalar_lea.vmem %s1, %s339
        %p341 = pneg %p86
        %p342 = pneg %p83
        %p343 = scmp.lt.s32.totalorder %s27, 1
        %s344 = scalar_select %p343, %s27, 1
        %s345 = smul.addr %s344, 8
        %s346 = smul.addr %s345, 8
        %s347 = scalar_lea.vmem %s2, %s346
        %p348 = pneg %p112
        %p349 = pneg %p109
        %p350 = pneg %p133
        %p351 = pneg %p130
        %p352 = pneg %p154
        %p353 = pneg %p151
        %p354 = pneg %p175
        %p355 = pneg %p172
        %p356 = pneg %p196
        %p357 = pneg %p193
        %p358 = pneg %p224
        %p359 = pneg %p221
        %p360 = scmp.lt.s32.totalorder %s27, 1
        %s361 = scalar_select %p360, %s27, 1
        %p362 = scmp.lt.s32.totalorder %s28, 0
        %s363 = scalar_select %p362, %s28, 0
        %s364 = smul.addr %s361, 8
        %s365 = sadd.s32 %s363, %s364
        %s366 = smul.addr %s365, 8
        %s367 = scalar_lea.vmem %s7, %s366
        %p368 = pneg %p252
        %p369 = pneg %p249
        %s370 = sand.u32 %s239, 1
        %s371 = scalar_lea.sflag [#allocation3], %s370
        %s372 = sand.u32 %s239, 1
        %s373 = smul.addr %s372, 64
        %s374 = scalar_lea.vmem [#allocation2], %s373
        %p375 = scmp.lt.s32.totalorder %s27, 1
        %s376 = scalar_select %p375, %s27, 1
        %p377 = scmp.lt.s32.totalorder %s28, 0
        %s378 = scalar_select %p377, %s28, 0
        %s379 = smul.addr %s376, 8
        %s380 = sadd.s32 %s378, %s379
        %s381 = smul.addr %s380, 8
        %s382 = scalar_lea.vmem %s0, %s381
        %s383 = smul.u32 8, %s28
        %p384 = scmp.lt.s32.totalorder %s27, 1
        %s385 = scalar_select %p384, %s27, 1
        %p386 = scmp.lt.s32.totalorder %s383, 7
        %s387 = scalar_select %p386, %s383, 7
        %s388 = smul.addr %s385, 8
        %s389 = sadd.s32 %s387, %s388
        %s390 = smul.addr %s389, 8
        %s391 = scalar_lea.vmem %s1, %s390
        %s392 = smul.u32 8, %s28
        %p393 = scmp.lt.s32.totalorder %s27, 1
        %s394 = scalar_select %p393, %s27, 1
        %s395 = smul.addr %s394, 8
        %s396 = smul.addr %s395, 8
        %s397 = scalar_lea.vmem %s2, %s396
        %p398 = scmp.lt.s32.totalorder %s27, 1
        %s399 = scalar_select %p398, %s27, 1
        %p400 = scmp.lt.s32.totalorder %s28, 0
        %s401 = scalar_select %p400, %s28, 0
        %s402 = smul.addr %s399, 8
        %s403 = sadd.s32 %s401, %s402
        %s404 = smul.addr %s403, 8
        %s405 = scalar_lea.vmem %s7, %s404
        %s406 = smul.u32 8, %s28
        %v407 = vld [vmem:[%s382] sm:$0xff]
        %v408 = vld [vmem:[%s382 + $0x8] sm:$0xff]
        %v409 = vld [vmem:[%s382 + $0x10] sm:$0xff]
        %v410 = vld [vmem:[%s382 + $0x18] sm:$0xff]
        %v411 = vld [vmem:[%s382 + $0x20] sm:$0xff]
        %v412 = vld [vmem:[%s382 + $0x28] sm:$0xff]
        %v413 = vld [vmem:[%s382 + $0x30] sm:$0xff]
        %v414 = vld [vmem:[%s382 + $0x38] sm:$0xff]
        %v415 = vld [vmem:[%s391] sm:$0xff]
        %v416 = vld [vmem:[%s391 + $0x8] sm:$0xff]
        %v417 = vld [vmem:[%s391 + $0x10] sm:$0xff]
        %v418 = vld [vmem:[%s391 + $0x18] sm:$0xff]
        %v419 = vld [vmem:[%s391 + $0x20] sm:$0xff]
        %v420 = vld [vmem:[%s391 + $0x28] sm:$0xff]
        %v421 = vld [vmem:[%s391 + $0x30] sm:$0xff]
        %v422 = vld [vmem:[%s391 + $0x38] sm:$0xff]
        %v423 = vld [vmem:[%s3] sm:$0xff]
        %v424 = vld [vmem:[%s3 + $0x8] sm:$0xff]
        %v425 = vld [vmem:[%s5] sm:$0xff]
        %v426 = vld [vmem:[%s5 + $0x8] sm:$0xff]
        %v427 = vld [vmem:[%s5 + $0x10] sm:$0xff]
        %v428 = vld [vmem:[%s5 + $0x18] sm:$0xff]
        %v429 = vld [vmem:[%s5 + $0x20] sm:$0xff]
        %v430 = vld [vmem:[%s5 + $0x28] sm:$0xff]
        %v431 = vld [vmem:[%s5 + $0x30] sm:$0xff]
        %v432 = vld [vmem:[%s5 + $0x38] sm:$0xff]
        %vm433 = vcmask 523264
        %v435 = vsel %vm433, %v423, 0
        %v438 = vsel %vm433, %v424, 0
        %v441 = vsel %vm433, %v415, 0
        %v444 = vsel %vm433, %v416, 0
        %v447 = vsel %vm433, %v417, 0
        %v450 = vsel %vm433, %v418, 0
        %v453 = vsel %vm433, %v419, 0
        %v456 = vsel %vm433, %v420, 0
        %v459 = vsel %vm433, %v421, 0
        %v462 = vsel %vm433, %v422, 0
        %464 = vmatpush.xpose.msra.mxu0 0.0
        %465 = vmatpush.xpose.msra.mxu0 0.0
        %466 = vmatpush.xpose.msra.mxu0 0.0
        %467 = vmatpush.xpose.msra.mxu0 0.0
        %468 = vmatpush.xpose.msra.mxu0 0.0
        %469 = vmatpush.xpose.msra.mxu0 0.0
        %470 = vmatpush.xpose.msra.mxu0 0.0
        %471 = vmatpush.xpose.msra.mxu0 0.0
        %472 = vmatpush.xpose.msra.mxu0 %v462
        %473 = vmatpush.xpose.msra.mxu0 %v459
        %474 = vmatpush.xpose.msra.mxu0 %v456
        %475 = vmatpush.xpose.msra.mxu0 %v453
        %476 = vmatpush.xpose.msra.mxu0 %v450
        %477 = vmatpush.xpose.msra.mxu0 %v447
        %478 = vmatpush.xpose.msra.mxu0 %v444
        %479 = vmatpush.xpose.msra.mxu0 %v441
        %480 = vmatmul.f32.gmra.mxu0 %v435
        %v481 = vpop.f32.mrf.mxu0
        %v482 = vadd.f32 0.0, %v481
        %483 = vmatmul.f32.gmra.mxu0 %v438
        %v484 = vpop.f32.mrf.mxu0
        %v485 = vadd.f32 0.0, %v484
        %486 = vdwg.mxu0
        %487 = vmatpush.msra.mxu0 0.0
        %488 = vmatpush.msra.mxu0 0.0
        %489 = vmatpush.msra.mxu0 0.0
        %490 = vmatpush.msra.mxu0 0.0
        %491 = vmatpush.msra.mxu0 0.0
        %492 = vmatpush.msra.mxu0 0.0
        %493 = vmatpush.msra.mxu0 0.0
        %494 = vmatpush.msra.mxu0 0.0
        %495 = vmatpush.msra.mxu0 %v414
        %496 = vmatpush.msra.mxu0 %v413
        %497 = vmatpush.msra.mxu0 %v412
        %498 = vmatpush.msra.mxu0 %v411
        %499 = vmatpush.msra.mxu0 %v410
        %500 = vmatpush.msra.mxu0 %v409
        %501 = vmatpush.msra.mxu0 %v408
        %502 = vmatpush.msra.mxu0 %v407
        %503 = vmatmul.f32.gmra.mxu0 %v435
        %v504 = vpop.f32.mrf.mxu0
        %v505 = vadd.f32 %v482, %v504
        %506 = vmatmul.f32.gmra.mxu0 %v438
        %v507 = vpop.f32.mrf.mxu0
        %v508 = vadd.f32 %v485, %v507
        %509 = vdwg.mxu0
        %v510 = vld [vmem:[%s4] sm:$0xff]
        %v511 = vld [vmem:[%s4 + $0x8] sm:$0xff]
        %513 = vset.pattern.permute.xlu0 0
        %514 = vperm.xlu0 %513, %v510
        %v515 = vpop.permute.xlu0 %514
        %518 = vset.pattern.permute.xlu0 0
        %519 = vperm.xlu0 %518, %v511
        %v520 = vpop.permute.xlu0 %519
        %v522 = vadd.f32 %v505, %v515
        %v523 = vadd.f32 %v508, %v520
        %v524 = vmax.f32 %v522, 0.0
        %v525 = vmax.f32 %v523, 0.0
        %v526 = vld [vmem:[%s6] sm:$0xff]
        %v527 = vld [vmem:[%s6 + $0x8] sm:$0xff]
        %v528 = vld [vmem:[%s6 + $0x10] sm:$0xff]
        %v529 = vld [vmem:[%s6 + $0x18] sm:$0xff]
        %v530 = vld [vmem:[%s6 + $0x20] sm:$0xff]
        %v531 = vld [vmem:[%s6 + $0x28] sm:$0xff]
        %v532 = vld [vmem:[%s6 + $0x30] sm:$0xff]
        %v533 = vld [vmem:[%s6 + $0x38] sm:$0xff]
        %535 = vset.pattern.permute.xlu0 0
        %536 = vperm.xlu0 %535, %v526
        %v537 = vpop.permute.xlu0 %536
        %540 = vset.pattern.permute.xlu0 0
        %541 = vperm.xlu0 %540, %v527
        %v542 = vpop.permute.xlu0 %541
        %545 = vset.pattern.permute.xlu0 0
        %546 = vperm.xlu0 %545, %v528
        %v547 = vpop.permute.xlu0 %546
        %550 = vset.pattern.permute.xlu0 0
        %551 = vperm.xlu0 %550, %v529
        %v552 = vpop.permute.xlu0 %551
        %555 = vset.pattern.permute.xlu0 0
        %556 = vperm.xlu0 %555, %v530
        %v557 = vpop.permute.xlu0 %556
        %560 = vset.pattern.permute.xlu0 0
        %561 = vperm.xlu0 %560, %v531
        %v562 = vpop.permute.xlu0 %561
        %565 = vset.pattern.permute.xlu0 0
        %566 = vperm.xlu0 %565, %v532
        %v567 = vpop.permute.xlu0 %566
        %570 = vset.pattern.permute.xlu0 0
        %571 = vperm.xlu0 %570, %v533
        %v572 = vpop.permute.xlu0 %571
        %vm574 = vcmask 130048
        %v576 = vsel %vm574, %v425, 0
        %v579 = vsel %vm574, %v426, 0
        %v582 = vsel %vm574, %v427, 0
        %v585 = vsel %vm574, %v428, 0
        %v588 = vsel %vm574, %v429, 0
        %v591 = vsel %vm574, %v430, 0
        %v594 = vsel %vm574, %v431, 0
        %v597 = vsel %vm574, %v432, 0
        %599 = vmatpush.msra.mxu0 0.0
        %600 = vmatpush.msra.mxu0 0.0
        %601 = vmatpush.msra.mxu0 0.0
        %602 = vmatpush.msra.mxu0 0.0
        %603 = vmatpush.msra.mxu0 0.0
        %604 = vmatpush.msra.mxu0 0.0
        %605 = vmatpush.msra.mxu0 0.0
        %606 = vmatpush.msra.mxu0 0.0
        %607 = vmatpush.msra.mxu0 0.0
        %608 = vmatpush.msra.mxu0 0.0
        %609 = vmatpush.msra.mxu0 0.0
        %610 = vmatpush.msra.mxu0 0.0
        %611 = vmatpush.msra.mxu0 0.0
        %612 = vmatpush.msra.mxu0 0.0
        %613 = vmatpush.msra.mxu0 %v525
        %614 = vmatpush.msra.mxu0 %v524
        %615 = vmatmul.f32.gmra.mxu0 %v576
        %v616 = vpop.f32.mrf.mxu0
        %v617 = vadd.f32 %v537, %v616
        %618 = vmatmul.f32.gmra.mxu0 %v579
        %v619 = vpop.f32.mrf.mxu0
        %v620 = vadd.f32 %v542, %v619
        %621 = vmatmul.f32.gmra.mxu0 %v582
        %v622 = vpop.f32.mrf.mxu0
        %v623 = vadd.f32 %v547, %v622
        %624 = vmatmul.f32.gmra.mxu0 %v585
        %v625 = vpop.f32.mrf.mxu0
        %v626 = vadd.f32 %v552, %v625
        %627 = vmatmul.f32.gmra.mxu0 %v588
        %v628 = vpop.f32.mrf.mxu0
        %v629 = vadd.f32 %v557, %v628
        %630 = vmatmul.f32.gmra.mxu0 %v591
        %v631 = vpop.f32.mrf.mxu0
        %v632 = vadd.f32 %v562, %v631
        %633 = vmatmul.f32.gmra.mxu0 %v594
        %v634 = vpop.f32.mrf.mxu0
        %v635 = vadd.f32 %v567, %v634
        %636 = vmatmul.f32.gmra.mxu0 %v597
        %v637 = vpop.f32.mrf.mxu0
        %v638 = vadd.f32 %v572, %v637
        %639 = vdwg.mxu0
        %v640 = vld [vmem:[%s397] sm:$0xff]
        %v641 = vld [vmem:[%s397 + $0x8] sm:$0xff]
        %v642 = vld [vmem:[%s397 + $0x10] sm:$0xff]
        %v643 = vld [vmem:[%s397 + $0x18] sm:$0xff]
        %v644 = vld [vmem:[%s397 + $0x20] sm:$0xff]
        %v645 = vld [vmem:[%s397 + $0x28] sm:$0xff]
        %v646 = vld [vmem:[%s397 + $0x30] sm:$0xff]
        %v647 = vld [vmem:[%s397 + $0x38] sm:$0xff]
        %649 = vset.pattern.permute.xlu0 0
        %650 = vperm.xlu0 %649, %v640
        %v651 = vpop.permute.xlu0 %650
        %654 = vset.pattern.permute.xlu0 0
        %655 = vperm.xlu0 %654, %v641
        %v656 = vpop.permute.xlu0 %655
        %659 = vset.pattern.permute.xlu0 0
        %660 = vperm.xlu0 %659, %v642
        %v661 = vpop.permute.xlu0 %660
        %664 = vset.pattern.permute.xlu0 0
        %665 = vperm.xlu0 %664, %v643
        %v666 = vpop.permute.xlu0 %665
        %669 = vset.pattern.permute.xlu0 0
        %670 = vperm.xlu0 %669, %v644
        %v671 = vpop.permute.xlu0 %670
        %674 = vset.pattern.permute.xlu0 0
        %675 = vperm.xlu0 %674, %v645
        %v676 = vpop.permute.xlu0 %675
        %679 = vset.pattern.permute.xlu0 0
        %680 = vperm.xlu0 %679, %v646
        %v681 = vpop.permute.xlu0 %680
        %684 = vset.pattern.permute.xlu0 0
        %685 = vperm.xlu0 %684, %v647
        %v686 = vpop.permute.xlu0 %685
        %v688 = vadd.f32 %v617, %v651
        %v689 = vadd.f32 %v620, %v656
        %v690 = vadd.f32 %v623, %v661
        %v691 = vadd.f32 %v626, %v666
        %v692 = vadd.f32 %v629, %v671
        %v693 = vadd.f32 %v632, %v676
        %v694 = vadd.f32 %v635, %v681
        %v695 = vadd.f32 %v638, %v686
        %v696 = vxor.u32 %v688, 2147483648
        %v697 = vxor.u32 %v689, 2147483648
        %v698 = vxor.u32 %v690, 2147483648
        %v699 = vxor.u32 %v691, 2147483648
        %v700 = vxor.u32 %v692, 2147483648
        %v701 = vxor.u32 %v693, 2147483648
        %v702 = vxor.u32 %v694, 2147483648
        %v703 = vxor.u32 %v695, 2147483648
        %v704 = vmul.f32 %v696, 1.442695
        %v705 = vpow.pop %v704
        %v706 = vmul.f32 %v697, 1.442695
        %v707 = vpow.pop %v706
        %v708 = vmul.f32 %v698, 1.442695
        %v709 = vpow.pop %v708
        %v710 = vmul.f32 %v699, 1.442695
        %v711 = vpow.pop %v710
        %v712 = vmul.f32 %v700, 1.442695
        %v713 = vpow.pop %v712
        %v714 = vmul.f32 %v701, 1.442695
        %v715 = vpow.pop %v714
        %v716 = vmul.f32 %v702, 1.442695
        %v717 = vpow.pop %v716
        %v718 = vmul.f32 %v703, 1.442695
        %v719 = vpow.pop %v718
        %v720 = vadd.f32 %v705, 1.0
        %v721 = vadd.f32 %v707, 1.0
        %v722 = vadd.f32 %v709, 1.0
        %v723 = vadd.f32 %v711, 1.0
        %v724 = vadd.f32 %v713, 1.0
        %v725 = vadd.f32 %v715, 1.0
        %v726 = vadd.f32 %v717, 1.0
        %v727 = vadd.f32 %v719, 1.0
        %v728 = vrcp.pop %v720
        %v729 = vmul.f32 %v720, %v728
        %v730 = vsub.f32 1.0, %v729
        %v731 = vmul.f32 %v728, %v730
        %v732 = vadd.f32 %v728, %v731
        %vm733 = vweird.f32 %v720
        %vm734 = vweird.f32 %v728
        %vm735 = vmor %vm733, %vm734
        %v736 = vsel %vm735, %v728, %v732
        %v737 = vand.u32 2147483647, %v720
        %vm738 = vcmp.eq.f32.partialorder %v737, 8.507059e+37
        %v739 = vand.u32 %v720, 2147483648
        %v740 = vor.u32 1.1754944e-38, %v739
        %v741 = vsel %vm738, %v740, %v736
        %v742 = vmul.f32 1.0, %v741
        %v743 = vrcp.pop %v721
        %v744 = vmul.f32 %v721, %v743
        %v745 = vsub.f32 1.0, %v744
        %v746 = vmul.f32 %v743, %v745
        %v747 = vadd.f32 %v743, %v746
        %vm748 = vweird.f32 %v721
        %vm749 = vweird.f32 %v743
        %vm750 = vmor %vm748, %vm749
        %v751 = vsel %vm750, %v743, %v747
        %v752 = vand.u32 2147483647, %v721
        %vm753 = vcmp.eq.f32.partialorder %v752, 8.507059e+37
        %v754 = vand.u32 %v721, 2147483648
        %v755 = vor.u32 1.1754944e-38, %v754
        %v756 = vsel %vm753, %v755, %v751
        %v757 = vmul.f32 1.0, %v756
        %v758 = vrcp.pop %v722
        %v759 = vmul.f32 %v722, %v758
        %v760 = vsub.f32 1.0, %v759
        %v761 = vmul.f32 %v758, %v760
        %v762 = vadd.f32 %v758, %v761
        %vm763 = vweird.f32 %v722
        %vm764 = vweird.f32 %v758
        %vm765 = vmor %vm763, %vm764
        %v766 = vsel %vm765, %v758, %v762
        %v767 = vand.u32 2147483647, %v722
        %vm768 = vcmp.eq.f32.partialorder %v767, 8.507059e+37
        %v769 = vand.u32 %v722, 2147483648
        %v770 = vor.u32 1.1754944e-38, %v769
        %v771 = vsel %vm768, %v770, %v766
        %v772 = vmul.f32 1.0, %v771
        %v773 = vrcp.pop %v723
        %v774 = vmul.f32 %v723, %v773
        %v775 = vsub.f32 1.0, %v774
        %v776 = vmul.f32 %v773, %v775
        %v777 = vadd.f32 %v773, %v776
        %vm778 = vweird.f32 %v723
        %vm779 = vweird.f32 %v773
        %vm780 = vmor %vm778, %vm779
        %v781 = vsel %vm780, %v773, %v777
        %v782 = vand.u32 2147483647, %v723
        %vm783 = vcmp.eq.f32.partialorder %v782, 8.507059e+37
        %v784 = vand.u32 %v723, 2147483648
        %v785 = vor.u32 1.1754944e-38, %v784
        %v786 = vsel %vm783, %v785, %v781
        %v787 = vmul.f32 1.0, %v786
        %v788 = vrcp.pop %v724
        %v789 = vmul.f32 %v724, %v788
        %v790 = vsub.f32 1.0, %v789
        %v791 = vmul.f32 %v788, %v790
        %v792 = vadd.f32 %v788, %v791
        %vm793 = vweird.f32 %v724
        %vm794 = vweird.f32 %v788
        %vm795 = vmor %vm793, %vm794
        %v796 = vsel %vm795, %v788, %v792
        %v797 = vand.u32 2147483647, %v724
        %vm798 = vcmp.eq.f32.partialorder %v797, 8.507059e+37
        %v799 = vand.u32 %v724, 2147483648
        %v800 = vor.u32 1.1754944e-38, %v799
        %v801 = vsel %vm798, %v800, %v796
        %v802 = vmul.f32 1.0, %v801
        %v803 = vrcp.pop %v725
        %v804 = vmul.f32 %v725, %v803
        %v805 = vsub.f32 1.0, %v804
        %v806 = vmul.f32 %v803, %v805
        %v807 = vadd.f32 %v803, %v806
        %vm808 = vweird.f32 %v725
        %vm809 = vweird.f32 %v803
        %vm810 = vmor %vm808, %vm809
        %v811 = vsel %vm810, %v803, %v807
        %v812 = vand.u32 2147483647, %v725
        %vm813 = vcmp.eq.f32.partialorder %v812, 8.507059e+37
        %v814 = vand.u32 %v725, 2147483648
        %v815 = vor.u32 1.1754944e-38, %v814
        %v816 = vsel %vm813, %v815, %v811
        %v817 = vmul.f32 1.0, %v816
        %v818 = vrcp.pop %v726
        %v819 = vmul.f32 %v726, %v818
        %v820 = vsub.f32 1.0, %v819
        %v821 = vmul.f32 %v818, %v820
        %v822 = vadd.f32 %v818, %v821
        %vm823 = vweird.f32 %v726
        %vm824 = vweird.f32 %v818
        %vm825 = vmor %vm823, %vm824
        %v826 = vsel %vm825, %v818, %v822
        %v827 = vand.u32 2147483647, %v726
        %vm828 = vcmp.eq.f32.partialorder %v827, 8.507059e+37
        %v829 = vand.u32 %v726, 2147483648
        %v830 = vor.u32 1.1754944e-38, %v829
        %v831 = vsel %vm828, %v830, %v826
        %v832 = vmul.f32 1.0, %v831
        %v833 = vrcp.pop %v727
        %v834 = vmul.f32 %v727, %v833
        %v835 = vsub.f32 1.0, %v834
        %v836 = vmul.f32 %v833, %v835
        %v837 = vadd.f32 %v833, %v836
        %vm838 = vweird.f32 %v727
        %vm839 = vweird.f32 %v833
        %vm840 = vmor %vm838, %vm839
        %v841 = vsel %vm840, %v833, %v837
        %v842 = vand.u32 2147483647, %v727
        %vm843 = vcmp.eq.f32.partialorder %v842, 8.507059e+37
        %v844 = vand.u32 %v727, 2147483648
        %v845 = vor.u32 1.1754944e-38, %v844
        %v846 = vsel %vm843, %v845, %v841
        %v847 = vmul.f32 1.0, %v846
        %v848 = vmul.f32 %v407, %v742
        %v849 = vmul.f32 %v408, %v757
        %v850 = vmul.f32 %v409, %v772
        %v851 = vmul.f32 %v410, %v787
        %v852 = vmul.f32 %v411, %v802
        %v853 = vmul.f32 %v412, %v817
        %v854 = vmul.f32 %v413, %v832
        %v855 = vmul.f32 %v414, %v847
        %856 = vst.msk [vmem:[%s405] sm:$0xff] %vm433, %v848
        %857 = vst.msk [vmem:[%s405 + $0x8] sm:$0xff] %vm433, %v849
        %858 = vst.msk [vmem:[%s405 + $0x10] sm:$0xff] %vm433, %v850
        %859 = vst.msk [vmem:[%s405 + $0x18] sm:$0xff] %vm433, %v851
        %860 = vst.msk [vmem:[%s405 + $0x20] sm:$0xff] %vm433, %v852
        %861 = vst.msk [vmem:[%s405 + $0x28] sm:$0xff] %vm433, %v853
        %862 = vst.msk [vmem:[%s405 + $0x30] sm:$0xff] %vm433, %v854
        %863 = vst.msk [vmem:[%s405 + $0x38] sm:$0xff] %vm433, %v855
        %v864 = vlaneseq
        %v865 = vshrl.u32 %v864, 7
        %v866 = vadd.s32 %v865, 8
        %v867 = vadd.s32 %v865, 16
        %v868 = vadd.s32 %v865, 24
        %v869 = vadd.s32 %v865, 32
        %v870 = vadd.s32 %v865, 40
        %v871 = vadd.s32 %v865, 48
        %v872 = vadd.s32 %v865, 56
        %v873 = vlaneseq
        %v874 = vand.u32 %v873, 127
        %vm875 = vcmp.eq.s32.totalorder %v865, %v874
        %vm876 = vcmp.eq.s32.totalorder %v866, %v874
        %vm877 = vcmp.eq.s32.totalorder %v867, %v874
        %vm878 = vcmp.eq.s32.totalorder %v868, %v874
        %vm879 = vcmp.eq.s32.totalorder %v869, %v874
        %vm880 = vcmp.eq.s32.totalorder %v870, %v874
        %vm881 = vcmp.eq.s32.totalorder %v871, %v874
        %vm882 = vcmp.eq.s32.totalorder %v872, %v874
        %v883 = vsel %vm875, 1, 0
        %v884 = vsel %vm876, 1, 0
        %v885 = vsel %vm877, 1, 0
        %v886 = vsel %vm878, 1, 0
        %v887 = vsel %vm879, 1, 0
        %v888 = vsel %vm880, 1, 0
        %v889 = vsel %vm881, 1, 0
        %v890 = vsel %vm882, 1, 0
        %v891 = vcvt.s32.f32 %v883
        %v892 = vcvt.s32.f32 %v884
        %v893 = vcvt.s32.f32 %v885
        %v894 = vcvt.s32.f32 %v886
        %v895 = vcvt.s32.f32 %v887
        %v896 = vcvt.s32.f32 %v888
        %v897 = vcvt.s32.f32 %v889
        %v898 = vcvt.s32.f32 %v890
        %899 = vxpose.xlu0.b32.start [1/16] %v742, 128
        %900 = vxpose.xlu0.b32.cont [2/16] %v757, 128
        %901 = vxpose.xlu0.b32.cont [3/16] %v772, 128
        %902 = vxpose.xlu0.b32.cont [4/16] %v787, 128
        %903 = vxpose.xlu0.b32.cont [5/16] %v802, 128
        %904 = vxpose.xlu0.b32.cont [6/16] %v817, 128
        %905 = vxpose.xlu0.b32.cont [7/16] %v832, 128
        %906 = vxpose.xlu0.b32.cont [8/16] %v847, 128
        %907 = vxpose.xlu0.b32.cont [9/16] 0.0, 128
        %908 = vxpose.xlu0.b32.cont [10/16] 0.0, 128
        %909 = vxpose.xlu0.b32.cont [11/16] 0.0, 128
        %910 = vxpose.xlu0.b32.cont [12/16] 0.0, 128
        %911 = vxpose.xlu0.b32.cont [13/16] 0.0, 128
        %912 = vxpose.xlu0.b32.cont [14/16] 0.0, 128
        %913 = vxpose.xlu0.b32.cont [15/16] 0.0, 128
        %914 = vxpose.xlu0.b32.end [16/16] 0.0, 128
        %v915 = vpop.trf.xlu0
        %v916 = vpop.trf.xlu0
        %v917 = vpop.trf.xlu0
        %v918 = vpop.trf.xlu0
        %v919 = vpop.trf.xlu0
        %v920 = vpop.trf.xlu0
        %v921 = vpop.trf.xlu0
        %v922 = vpop.trf.xlu0
        %v923 = vpop.trf.xlu0
        %v924 = vpop.trf.xlu0
        %v925 = vpop.trf.xlu0
        %v926 = vpop.trf.xlu0
        %v927 = vpop.trf.xlu0
        %v928 = vpop.trf.xlu0
        %v929 = vpop.trf.xlu0
        %v930 = vpop.trf.xlu0
        %v932 = vsel %vm433, %v915, 0
        %v935 = vsel %vm433, %v916, 0
        %v938 = vsel %vm433, %v917, 0
        %v941 = vsel %vm433, %v918, 0
        %v944 = vsel %vm433, %v919, 0
        %v947 = vsel %vm433, %v920, 0
        %v950 = vsel %vm433, %v921, 0
        %v953 = vsel %vm433, %v922, 0
        %955 = vmatpush.msra.mxu0 0.0
        %956 = vmatpush.msra.mxu0 0.0
        %957 = vmatpush.msra.mxu0 0.0
        %958 = vmatpush.msra.mxu0 0.0
        %959 = vmatpush.msra.mxu0 0.0
        %960 = vmatpush.msra.mxu0 0.0
        %961 = vmatpush.msra.mxu0 0.0
        %962 = vmatpush.msra.mxu0 0.0
        %963 = vmatpush.msra.mxu0 %v898
        %964 = vmatpush.msra.mxu0 %v897
        %965 = vmatpush.msra.mxu0 %v896
        %966 = vmatpush.msra.mxu0 %v895
        %967 = vmatpush.msra.mxu0 %v894
        %968 = vmatpush.msra.mxu0 %v893
        %969 = vmatpush.msra.mxu0 %v892
        %970 = vmatpush.msra.mxu0 %v891
        %971 = vmatmul.f32.gmra.mxu0 %v932
        %v972 = vpop.f32.mrf.mxu0
        %v973 = vadd.f32 0.0, %v972
        %974 = vmatmul.f32.gmra.mxu0 %v935
        %v975 = vpop.f32.mrf.mxu0
        %v976 = vadd.f32 0.0, %v975
        %977 = vmatmul.f32.gmra.mxu0 %v938
        %v978 = vpop.f32.mrf.mxu0
        %v979 = vadd.f32 0.0, %v978
        %980 = vmatmul.f32.gmra.mxu0 %v941
        %v981 = vpop.f32.mrf.mxu0
        %v982 = vadd.f32 0.0, %v981
        %983 = vmatmul.f32.gmra.mxu0 %v944
        %v984 = vpop.f32.mrf.mxu0
        %v985 = vadd.f32 0.0, %v984
        %986 = vmatmul.f32.gmra.mxu0 %v947
        %v987 = vpop.f32.mrf.mxu0
        %v988 = vadd.f32 0.0, %v987
        %989 = vmatmul.f32.gmra.mxu0 %v950
        %v990 = vpop.f32.mrf.mxu0
        %v991 = vadd.f32 0.0, %v990
        %992 = vmatmul.f32.gmra.mxu0 %v953
        %v993 = vpop.f32.mrf.mxu0
        %v994 = vadd.f32 0.0, %v993
        %995 = vdwg.mxu0
        %v996 = vmul.f32 %v415, %v973
        %v997 = vmul.f32 %v416, %v976
        %v998 = vmul.f32 %v417, %v979
        %v999 = vmul.f32 %v418, %v982
        %v1000 = vmul.f32 %v419, %v985
        %v1001 = vmul.f32 %v420, %v988
        %v1002 = vmul.f32 %v421, %v991
        %v1003 = vmul.f32 %v422, %v994
        %v1004 = vsub.f32 %v415, %v996
        %v1005 = vsub.f32 %v416, %v997
        %v1006 = vsub.f32 %v417, %v998
        %v1007 = vsub.f32 %v418, %v999
        %v1008 = vsub.f32 %v419, %v1000
        %v1009 = vsub.f32 %v420, %v1001
        %v1010 = vsub.f32 %v421, %v1002
        %v1011 = vsub.f32 %v422, %v1003
        %1012 = vst.msk [vmem:[%s374] sm:$0xff] %vm433, %v1004
        %1013 = vst.msk [vmem:[%s374 + $0x8] sm:$0xff] %vm433, %v1005
        %1014 = vst.msk [vmem:[%s374 + $0x10] sm:$0xff] %vm433, %v1006
        %1015 = vst.msk [vmem:[%s374 + $0x18] sm:$0xff] %vm433, %v1007
        %1016 = vst.msk [vmem:[%s374 + $0x20] sm:$0xff] %vm433, %v1008
        %1017 = vst.msk [vmem:[%s374 + $0x28] sm:$0xff] %vm433, %v1009
        %1018 = vst.msk [vmem:[%s374 + $0x30] sm:$0xff] %vm433, %v1010
        %1019 = vst.msk [vmem:[%s374 + $0x38] sm:$0xff] %vm433, %v1011
        %p1020 = scmp.lt.s32.totalorder %s27, 1
        %s1021 = scalar_select %p1020, %s27, 1
        %p1022 = scmp.lt.s32.totalorder %s28, 0
        %s1023 = scalar_select %p1022, %s28, 0
        %s1024 = smul.addr %s1021, 8
        %s1025 = sadd.s32 %s1023, %s1024
        %s1026 = smul.addr %s1025, 8
        %s1027 = scalar_lea.vmem %s7, %s1026
        %s1028 = sand.u32 %s239, 1
        %s1029 = scalar_lea.sflag [#allocation3], %s1028
        %s1030 = sand.u32 %s239, 1
        %s1031 = smul.addr %s1030, 64
        %s1032 = scalar_lea.vmem [#allocation2], %s1031
        // Predicated region
        $region49: #{aff_forward.1} parent=47 // pred_check
          %p1033 = pneg %p221
        $region50: #{aff_forward.1} parent=47 // pred_check_branch
          %1035 = sbr.rel (%p1033) target = $region52
        $region51: #{aff_forward.1} parent=47 // pred_region
          _
        $region52: #{aff_forward.1} parent=47 // pred_fallthru
          _
        // Predicated region
        $region53: #{aff_forward.1} parent=47 // pred_check
          %p1036 = pneg %p249
        $region54: #{aff_forward.1} parent=47 // pred_check_branch
          %1038 = sbr.rel (%p1036) target = $region56
        $region55: #{aff_forward.1} parent=47 // pred_region
          %s1039 = smul.u32 8, %s28
          %1041 = vsyncadd %s1029, 0
          %s1042 = smul.addr %s27, 8
          %s1043 = sadd.s32 %s1039, %s1042
          %s1044 = smul.addr %s1043, 8
          %s1045 = scalar_lea.hbm %s8, %s1044
          %s1046 = sshll.u32 %s1032, 4
          %s1047 = int_to_ptr.vmem [resolvable:$true] %s1046
          %s1048 = sshll.u32 %s1045, 4
          %s1049 = int_to_ptr.hbm [resolvable:$true] %s1048
          %1054 = dma.vmem_to_hbm [thread:$0]  %s1047, 1024, %s1049, %s1029, 128, 128, 8
        $region56: #{aff_forward.1} parent=47 // pred_fallthru
          _
      $region48: #{aff_forward.1} parent=5 // pred_fallthru
        _
      %p1055 = scmp.le.s32.totalorder 2, %s18
      // Predicated region
      $region57: #{aff_forward.1} parent=5 // pred_check
        %p1056 = pneg %p1055
      $region58: #{aff_forward.1} parent=5 // pred_check_branch
        %1058 = sbr.rel (%p1056) target = $region60
      $region59: #{aff_forward.1} parent=5 // pred_region
        %s1059 = ssub.s32 %s18, 2
        // Predicated region
        $region61: #{aff_forward.1} parent=59 // pred_check
          %p1060 = pneg %p227
        $region62: #{aff_forward.1} parent=59 // pred_check_branch
          %1062 = sbr.rel (%p1060) target = $region64
        $region63: #{aff_forward.1} parent=59 // pred_region
          %p1063 = scmp.lt.s32.totalorder %s29, 1
          %s1064 = scalar_select %p1063, %s29, 1
          %p1065 = scmp.lt.s32.totalorder %s30, 0
          %s1066 = scalar_select %p1065, %s30, 0
          %s1067 = smul.addr %s1064, 8
          %s1068 = sadd.s32 %s1066, %s1067
          %s1069 = smul.addr %s1068, 8
          %s1070 = scalar_lea.vmem %s7, %s1069
        $region64: #{aff_forward.1} parent=59 // pred_fallthru
          _
        // Predicated region
        $region65: #{aff_forward.1} parent=59 // pred_check
          %p1071 = pneg %p255
        $region66: #{aff_forward.1} parent=59 // pred_check_branch
          %1073 = sbr.rel (%p1071) target = $region68
        $region67: #{aff_forward.1} parent=59 // pred_region
          %s1074 = sand.u32 %s240, 1
          %s1075 = scalar_lea.sflag [#allocation3], %s1074
          %s1076 = sand.u32 %s240, 1
          %s1077 = smul.addr %s1076, 64
          %s1078 = scalar_lea.vmem [#allocation2], %s1077
          %1080 = dma.done %s1075, 1024
        $region68: #{aff_forward.1} parent=59 // pred_fallthru
          _
      $region60: #{aff_forward.1} parent=5 // pred_fallthru
        _
    $region6: #{aff_forward.1} parent=1 // loop_footer
      %s22 = sadd.s32 1, %s18
    $region7: #{aff_forward.1} parent=1 // loop_footer_branch
      %17 = sbr.rel target = $region3
    $region8: #{aff_forward.1} parent=1 // loop_exit
      _
    %1081 = vsyncpa [#allocation3], 1
    %s1082 = scalar_lea.sflag [#allocation3], 1
    %1083 = vsyncpa %s1082, 1

</llo_original>
